<compile_context>
chip_gen: v6e
topology: v6e:2x2x1
jax: 0.10.0
libtpu: 0.0.40
codegen_flags: <defaults>
</compile_context>

<pallas_src>
import functools

import jax
import jax.numpy as jnp
from jax.experimental import pallas as pl
from jax.experimental.pallas import tpu as pltpu
import numpy as np

ARCH = [2, 128, 128, 128, 2]
LANE = 128


def mlp_kernel(x_ref, w0_ref, b0_ref, w1_ref, b1_ref, w2_ref, b2_ref,
               w3_ref, b3_ref, o_ref):
    # x_ref: (2, tile_b) -- features on sublanes, batch on lanes (lane-dense).
    x = x_ref[...]

    # Layer 0: Linear(2 -> 128) + ReLU.  K=2 contraction -> VPU broadcast-FMAs,
    # keeping the MXU free for the real matmuls.
    # w0_ref is torch-layout (out=128, in=2); b0_ref is a (128, 1) column.
    h = (w0_ref[:, 0:1] * x[0:1, :]
         + w0_ref[:, 1:2] * x[1:2, :]
         + b0_ref[...])
    h = jnp.maximum(h, 0.0)

    # Layers 1-2: Linear(128 -> 128) + ReLU on the MXU (h_new = W @ h in the
    # transposed domain), f32 accumulation; operands may be bf16.
    h = jnp.dot(w1_ref[...], h.astype(w1_ref.dtype),
                preferred_element_type=jnp.float32) + b1_ref[...]
    h = jnp.maximum(h, 0.0)
    h = jnp.dot(w2_ref[...], h.astype(w2_ref.dtype),
                preferred_element_type=jnp.float32) + b2_ref[...]
    h = jnp.maximum(h, 0.0)

    # Layer 3: Linear(128 -> 2), no activation.  K=128 is a real MXU contraction:
    # w3_ref is W3^T zero-padded to (8, 128); take the first 2 output rows and
    # add the (2, 1) bias.  Lane-dense (2, tile_b) store, no concat/reductions.
    o8 = jnp.dot(w3_ref[...], h.astype(w3_ref.dtype),
                 preferred_element_type=jnp.float32)
    d_out = o_ref.shape[0]
    o_ref[...] = (o8[0:d_out, :] + b3_ref[...]).astype(o_ref.dtype)


def _round_up(x, m):
    return ((x + m - 1) // m) * m


def _choose_tiling(B, tile_b):
    """Pick (tile_b, B_pad, grid): lane-multiple tile, padded batch, even grid
    step count when >1 step is possible (v7x TensorCore balance)."""
    tile_b = max(LANE, (int(tile_b) // LANE) * LANE)
    B_pad = _round_up(B, LANE)
    tile_b = min(tile_b, B_pad)
    B_pad = _round_up(B_pad, tile_b)
    grid = B_pad // tile_b
    # Prefer an even number of grid steps so dimension_semantics=("parallel",)
    # shards evenly across v7x's two TensorCores.  Halving a tile that is a
    # multiple of 2*LANE keeps it lane-aligned and still divides B_pad.
    if grid % 2 == 1 and tile_b % (2 * LANE) == 0:
        tile_b //= 2
        grid *= 2
    return tile_b, B_pad, grid


@functools.partial(jax.jit, static_argnames=("tile_b", "matmul_dtype"))
def nn_block_forward(x, params, *, tile_b=2048, matmul_dtype=jnp.float32):
    """x: (B, 2) float32.  params: list of (W(in,out), b(1,out)) per layer.

    matmul_dtype: operand dtype of the MXU matmuls (accumulation is always f32).
    float32 matches the PyTorch reference to ~1e-5; bfloat16 gives ~2-4x MXU
    throughput on v6e/v7x at ~1e-2-level error.
    """
    B, d_in = x.shape
    assert d_in == ARCH[0]
    d_out = ARCH[-1]
    d_out_pad = max(8, _round_up(d_out, 8))

    tile_b, B_pad, grid = _choose_tiling(B, tile_b)

    # Transposed, lane-dense layout (features on sublanes, batch on lanes).
    x_t = jnp.pad(x, ((0, B_pad - B), (0, 0))).T               # (2, B_pad)

    # Arrange parameters for the transposed-activation kernel.
    (w0, b0), (w1, b1), (w2, b2), (w3, b3) = params
    w3_pad = jnp.pad(w3.T, ((0, d_out_pad - d_out), (0, 0)))   # (8, 128)
    ops = [
        w0.T, b0.reshape(-1, 1),                               # (128,2), (128,1)
        w1.T.astype(matmul_dtype), b1.reshape(-1, 1),          # (128,128), (128,1)
        w2.T.astype(matmul_dtype), b2.reshape(-1, 1),          # (128,128), (128,1)
        w3_pad.astype(matmul_dtype), b3.reshape(-1, 1),        # (8,128), (2,1)
    ]

    # x / output tiled along the batch (lane) axis; params presented whole with a
    # constant index_map (never re-DMA'd across grid steps).
    x_spec = pl.BlockSpec((d_in, tile_b), lambda i: (0, i))
    o_spec = pl.BlockSpec((d_out, tile_b), lambda i: (0, i))
    param_specs = [pl.BlockSpec(p.shape, lambda i: (0, 0)) for p in ops]

    flops = 2 * B_pad * sum(ARCH[i] * ARCH[i + 1] for i in range(len(ARCH) - 1))
    param_bytes = int(sum(p.size * p.dtype.itemsize for p in ops))
    bytes_accessed = int(B_pad * (d_in + d_out) * 4 + param_bytes)

    out_t = pl.pallas_call(
        mlp_kernel,
        out_shape=jax.ShapeDtypeStruct((d_out, B_pad), x.dtype),
        grid_spec=pltpu.PrefetchScalarGridSpec(
            num_scalar_prefetch=0,
            grid=(grid,),
            in_specs=[x_spec] + param_specs,
            out_specs=o_spec,
        ),
        compiler_params=pltpu.CompilerParams(
            dimension_semantics=("parallel",)),
        cost_estimate=pl.CostEstimate(
            flops=flops, transcendentals=0, bytes_accessed=bytes_accessed),
    )(x_t, *ops)

    return out_t.T[:B]                                         # back to (B, 2)


def init_params(key):
    """Deterministic init mimicking torch.nn.Linear defaults:
    W, b ~ U(-1/sqrt(fan_in), 1/sqrt(fan_in)); W stored (in, out)."""
    params = []
    for i in range(len(ARCH) - 1):
        fan_in, fan_out = ARCH[i], ARCH[i + 1]
        key, kw, kb = jax.random.split(key, 3)
        bound = 1.0 / np.sqrt(fan_in)
        w = jax.random.uniform(kw, (fan_in, fan_out), jnp.float32, -bound, bound)
        b = jax.random.uniform(kb, (1, fan_out), jnp.float32, -bound, bound)
        params.append((w, b))
    return params


def reference_forward(x, params):
    h = x
    n = len(params)
    for i, (w, b) in enumerate(params):
        h = h @ w + b
        if i < n - 1:
            h = jnp.maximum(h, 0.0)
    return h


if __name__ == "__main__":
    key = jax.random.PRNGKey(0)
    k_x, k_p = jax.random.split(key)
    params = init_params(k_p)

    # Small batch (matches the module's toy usage); wrapper pads to a lane multiple.
    batch = 16
    x = jax.random.normal(k_x, (batch, ARCH[0]), jnp.float32)
    out = jax.block_until_ready(nn_block_forward(x, params))
    ref = jax.block_until_ready(reference_forward(x, params))
    np.testing.assert_allclose(np.asarray(out), np.asarray(ref), rtol=1e-5, atol=1e-5)

    # Larger batch: default tile_b=2048 -> 2 even grid steps (v7x both-core path).
    x_big = jax.random.normal(k_x, (4096, ARCH[0]), jnp.float32)
    out_big = jax.block_until_ready(nn_block_forward(x_big, params))
    ref_big = jax.block_until_ready(reference_forward(x_big, params))
    np.testing.assert_allclose(np.asarray(out_big), np.asarray(ref_big),
                               rtol=1e-5, atol=1e-5)

    # Odd-step case exercises the tile-halving heuristic (1024 -> tile 512, 2 steps).
    x_mid = jax.random.normal(k_x, (1024, ARCH[0]), jnp.float32)
    out_mid = jax.block_until_ready(nn_block_forward(x_mid, params))
    ref_mid = jax.block_until_ready(reference_forward(x_mid, params))
    np.testing.assert_allclose(np.asarray(out_mid), np.asarray(ref_mid),
                               rtol=1e-5, atol=1e-5)

    # Optional bf16-operand MXU path (v6e/v7x throughput); f32 accumulation,
    # checked at a loose tolerance consistent with bf16 operands.
    out_bf16 = jax.block_until_ready(
        nn_block_forward(x_big, params, matmul_dtype=jnp.bfloat16))
    np.testing.assert_allclose(np.asarray(out_bf16), np.asarray(ref_big),
                               rtol=5e-2, atol=5e-2)

    print("KERNEL_OK")
</pallas_src>

<mosaic_0001>
module attributes {stable_mosaic.version = 11 : i64} {
  func.func @mlp_kernel(%arg0: i32, %arg1: memref<2x128xf32, #tpu.memory_space<vmem>>, %arg2: memref<128x2xf32, #tpu.memory_space<vmem>>, %arg3: memref<128x1xf32, #tpu.memory_space<vmem>>, %arg4: memref<128x128xf32, #tpu.memory_space<vmem>>, %arg5: memref<128x1xf32, #tpu.memory_space<vmem>>, %arg6: memref<128x128xf32, #tpu.memory_space<vmem>>, %arg7: memref<128x1xf32, #tpu.memory_space<vmem>>, %arg8: memref<8x128xf32, #tpu.memory_space<vmem>>, %arg9: memref<2x1xf32, #tpu.memory_space<vmem>>, %arg10: memref<2x128xf32, #tpu.memory_space<vmem>>) attributes {dimension_semantics = [#tpu.dimension_semantics<parallel>], iteration_bounds = array<i64: 1>, scalar_prefetch = 0 : i64, scratch_operands = 0 : i64, tpu.core_type = #tpu.core_type<tc>, window_params = [{transform_indices = @transform_0, window_bounds = array<i64: 2, 128>}, {pipeline_mode = #tpu.pipeline_mode<synchronous>, transform_indices = @transform_1, window_bounds = array<i64: 128, 2>}, {pipeline_mode = #tpu.pipeline_mode<synchronous>, transform_indices = @transform_2, window_bounds = array<i64: 128, 1>}, {pipeline_mode = #tpu.pipeline_mode<synchronous>, transform_indices = @transform_3, window_bounds = array<i64: 128, 128>}, {pipeline_mode = #tpu.pipeline_mode<synchronous>, transform_indices = @transform_4, window_bounds = array<i64: 128, 1>}, {pipeline_mode = #tpu.pipeline_mode<synchronous>, transform_indices = @transform_5, window_bounds = array<i64: 128, 128>}, {pipeline_mode = #tpu.pipeline_mode<synchronous>, transform_indices = @transform_6, window_bounds = array<i64: 128, 1>}, {pipeline_mode = #tpu.pipeline_mode<synchronous>, transform_indices = @transform_7, window_bounds = array<i64: 8, 128>}, {pipeline_mode = #tpu.pipeline_mode<synchronous>, transform_indices = @transform_8, window_bounds = array<i64: 2, 1>}, {transform_indices = @transform_9, window_bounds = array<i64: 2, 128>}]} {
    %c0 = arith.constant 0 : index
    %c0_0 = arith.constant 0 : index
    %0 = vector.load %arg1[%c0, %c0_0] : memref<2x128xf32, #tpu.memory_space<vmem>>, vector<2x128xf32>
    %c0_1 = arith.constant 0 : index
    %c0_2 = arith.constant 0 : index
    %1 = vector.load %arg2[%c0_1, %c0_2] : memref<128x2xf32, #tpu.memory_space<vmem>>, vector<128x1xf32>
    %2 = vector.extract_strided_slice %0 {offsets = [0, 0], sizes = [1, 128], strides = [1, 1]} : vector<2x128xf32> to vector<1x128xf32>
    %3 = vector.broadcast %1 : vector<128x1xf32> to vector<128x128xf32>
    %4 = vector.broadcast %2 : vector<1x128xf32> to vector<128x128xf32>
    %5 = arith.mulf %3, %4 : vector<128x128xf32>
    %c0_3 = arith.constant 0 : index
    %c1 = arith.constant 1 : index
    %6 = vector.load %arg2[%c0_3, %c1] : memref<128x2xf32, #tpu.memory_space<vmem>>, vector<128x1xf32>
    %7 = vector.extract_strided_slice %0 {offsets = [1, 0], sizes = [1, 128], strides = [1, 1]} : vector<2x128xf32> to vector<1x128xf32>
    %8 = vector.broadcast %6 : vector<128x1xf32> to vector<128x128xf32>
    %9 = vector.broadcast %7 : vector<1x128xf32> to vector<128x128xf32>
    %10 = arith.mulf %8, %9 : vector<128x128xf32>
    %11 = arith.addf %5, %10 : vector<128x128xf32>
    %c0_4 = arith.constant 0 : index
    %c0_5 = arith.constant 0 : index
    %12 = vector.load %arg3[%c0_4, %c0_5] : memref<128x1xf32, #tpu.memory_space<vmem>>, vector<128x1xf32>
    %13 = vector.broadcast %12 : vector<128x1xf32> to vector<128x128xf32>
    %14 = arith.addf %11, %13 : vector<128x128xf32>
    %cst = arith.constant 0.000000e+00 : f32
    %15 = vector.broadcast %cst : f32 to vector<128x128xf32>
    %16 = arith.maximumf %14, %15 : vector<128x128xf32>
    %c0_6 = arith.constant 0 : index
    %c0_7 = arith.constant 0 : index
    %17 = vector.load %arg4[%c0_6, %c0_7] : memref<128x128xf32, #tpu.memory_space<vmem>>, vector<128x128xf32>
    %cst_8 = arith.constant dense<0.000000e+00> : vector<128x128xf32>
    %18 = tpu.matmul %17, %16, %cst_8 {dimension_numbers = #tpu.dot_dimension_numbers<[1], [0], [0], [1], [0, 0, 1, 1], [], []>} : vector<128x128xf32>, vector<128x128xf32>, vector<128x128xf32> -> vector<128x128xf32>
    %c0_9 = arith.constant 0 : index
    %c0_10 = arith.constant 0 : index
    %19 = vector.load %arg5[%c0_9, %c0_10] : memref<128x1xf32, #tpu.memory_space<vmem>>, vector<128x1xf32>
    %20 = vector.broadcast %19 : vector<128x1xf32> to vector<128x128xf32>
    %21 = arith.addf %18, %20 : vector<128x128xf32>
    %cst_11 = arith.constant 0.000000e+00 : f32
    %22 = vector.broadcast %cst_11 : f32 to vector<128x128xf32>
    %23 = arith.maximumf %21, %22 : vector<128x128xf32>
    %c0_12 = arith.constant 0 : index
    %c0_13 = arith.constant 0 : index
    %24 = vector.load %arg6[%c0_12, %c0_13] : memref<128x128xf32, #tpu.memory_space<vmem>>, vector<128x128xf32>
    %cst_14 = arith.constant dense<0.000000e+00> : vector<128x128xf32>
    %25 = tpu.matmul %24, %23, %cst_14 {dimension_numbers = #tpu.dot_dimension_numbers<[1], [0], [0], [1], [0, 0, 1, 1], [], []>} : vector<128x128xf32>, vector<128x128xf32>, vector<128x128xf32> -> vector<128x128xf32>
    %c0_15 = arith.constant 0 : index
    %c0_16 = arith.constant 0 : index
    %26 = vector.load %arg7[%c0_15, %c0_16] : memref<128x1xf32, #tpu.memory_space<vmem>>, vector<128x1xf32>
    %27 = vector.broadcast %26 : vector<128x1xf32> to vector<128x128xf32>
    %28 = arith.addf %25, %27 : vector<128x128xf32>
    %cst_17 = arith.constant 0.000000e+00 : f32
    %29 = vector.broadcast %cst_17 : f32 to vector<128x128xf32>
    %30 = arith.maximumf %28, %29 : vector<128x128xf32>
    %c0_18 = arith.constant 0 : index
    %c0_19 = arith.constant 0 : index
    %31 = vector.load %arg8[%c0_18, %c0_19] : memref<8x128xf32, #tpu.memory_space<vmem>>, vector<8x128xf32>
    %cst_20 = arith.constant dense<0.000000e+00> : vector<8x128xf32>
    %32 = tpu.matmul %31, %30, %cst_20 {dimension_numbers = #tpu.dot_dimension_numbers<[1], [0], [0], [1], [0, 0, 1, 1], [], []>} : vector<8x128xf32>, vector<128x128xf32>, vector<8x128xf32> -> vector<8x128xf32>
    %33 = vector.extract_strided_slice %32 {offsets = [0, 0], sizes = [2, 128], strides = [1, 1]} : vector<8x128xf32> to vector<2x128xf32>
    %c0_21 = arith.constant 0 : index
    %c0_22 = arith.constant 0 : index
    %34 = vector.load %arg9[%c0_21, %c0_22] : memref<2x1xf32, #tpu.memory_space<vmem>>, vector<2x1xf32>
    %35 = vector.broadcast %34 : vector<2x1xf32> to vector<2x128xf32>
    %36 = arith.addf %33, %35 : vector<2x128xf32>
    %c0_23 = arith.constant 0 : index
    %c0_24 = arith.constant 0 : index
    %37 = vector.load %arg10[%c0_23, %c0_24] : memref<2x128xf32, #tpu.memory_space<vmem>>, vector<2x128xf32>
    tpu.vector_store %arg10[%c0_23, %c0_24], %36 {strides = array<i32>} : memref<2x128xf32, #tpu.memory_space<vmem>>, vector<2x128xf32>,
    return
  }
  func.func @transform_0(%arg0: i32) -> (i32, i32) {
    %c0_i32 = arith.constant 0 : i32
    %c0_i32_0 = arith.constant 0 : i32
    return %c0_i32, %arg0 : i32, i32
  }
  func.func @transform_1(%arg0: i32) -> (i32, i32) {
    %c0_i32 = arith.constant 0 : i32
    %c0_i32_0 = arith.constant 0 : i32
    %c0_i32_1 = arith.constant 0 : i32
    return %c0_i32, %c0_i32_0 : i32, i32
  }
  func.func @transform_2(%arg0: i32) -> (i32, i32) {
    %c0_i32 = arith.constant 0 : i32
    %c0_i32_0 = arith.constant 0 : i32
    %c0_i32_1 = arith.constant 0 : i32
    return %c0_i32, %c0_i32_0 : i32, i32
  }
  func.func @transform_3(%arg0: i32) -> (i32, i32) {
    %c0_i32 = arith.constant 0 : i32
    %c0_i32_0 = arith.constant 0 : i32
    %c0_i32_1 = arith.constant 0 : i32
    return %c0_i32, %c0_i32_0 : i32, i32
  }
  func.func @transform_4(%arg0: i32) -> (i32, i32) {
    %c0_i32 = arith.constant 0 : i32
    %c0_i32_0 = arith.constant 0 : i32
    %c0_i32_1 = arith.constant 0 : i32
    return %c0_i32, %c0_i32_0 : i32, i32
  }
  func.func @transform_5(%arg0: i32) -> (i32, i32) {
    %c0_i32 = arith.constant 0 : i32
    %c0_i32_0 = arith.constant 0 : i32
    %c0_i32_1 = arith.constant 0 : i32
    return %c0_i32, %c0_i32_0 : i32, i32
  }
  func.func @transform_6(%arg0: i32) -> (i32, i32) {
    %c0_i32 = arith.constant 0 : i32
    %c0_i32_0 = arith.constant 0 : i32
    %c0_i32_1 = arith.constant 0 : i32
    return %c0_i32, %c0_i32_0 : i32, i32
  }
  func.func @transform_7(%arg0: i32) -> (i32, i32) {
    %c0_i32 = arith.constant 0 : i32
    %c0_i32_0 = arith.constant 0 : i32
    %c0_i32_1 = arith.constant 0 : i32
    return %c0_i32, %c0_i32_0 : i32, i32
  }
  func.func @transform_8(%arg0: i32) -> (i32, i32) {
    %c0_i32 = arith.constant 0 : i32
    %c0_i32_0 = arith.constant 0 : i32
    %c0_i32_1 = arith.constant 0 : i32
    return %c0_i32, %c0_i32_0 : i32, i32
  }
  func.func @transform_9(%arg0: i32) -> (i32, i32) {
    %c0_i32 = arith.constant 0 : i32
    %c0_i32_0 = arith.constant 0 : i32
    return %c0_i32, %arg0 : i32, i32
  }
}

</mosaic_0001>

<llo_original>
// kernel: nn_block_forward.1
$region0: #{nn_block_forward.1}
  #allocation0 [shape = 'u32[]', space=smem, size = 0x4, offset = 0x4, fixed_abs, tag = 'smem constant byte address 0x4 - core index']
  #allocation1 [shape = 'u32[144,128]{1,0:T(1,128)}', space=vmem, size = 0x12000, scoped, tag = 'internal scratch']
  %s0 = inlined_call_operand.vmem [shape: f32[2,128], index: 0, kind: input, shape index: {}]
  %s1 = inlined_call_operand.vmem [shape: f32[128,2], index: 1, kind: input, shape index: {}]
  %s2 = inlined_call_operand.vmem [shape: f32[128,1], index: 2, kind: input, shape index: {}]
  %s3 = inlined_call_operand.vmem [shape: f32[128,128], index: 3, kind: input, shape index: {}]
  %s4 = inlined_call_operand.vmem [shape: f32[128,1], index: 4, kind: input, shape index: {}]
  %s5 = inlined_call_operand.vmem [shape: f32[128,128], index: 5, kind: input, shape index: {}]
  %s6 = inlined_call_operand.vmem [shape: f32[128,1], index: 6, kind: input, shape index: {}]
  %s7 = inlined_call_operand.vmem [shape: f32[8,128], index: 7, kind: input, shape index: {}]
  %s8 = inlined_call_operand.vmem [shape: f32[2,1], index: 8, kind: input, shape index: {}]
  %s9 = inlined_call_operand.hbm [shape: f32[2,128], index: 9, kind: output, shape index: {}]
  %s10 = sld [smem:[#allocation0]]
  $region46: #{nn_block_forward.1} parent=0
    _
  %s12 = ssub.s32 1, %s10
  %s13 = scalar_select 0, %s12, %s10
  $region1: #{nn_block_forward.1} parent=0
    #allocation2 [shape = 'u8[1024]{0}', space=vmem, size = 0x400, scoped, tag = 'output window, operand 0, single buffered']
    #allocation3 [shape = 's32[1]{0}', space=sflag, size = 0x4, scoped, tag = 'scoped memory for nn_block_forward.1']
    %14 = vsyncpa [#allocation3], 0
    // Predicated region
    $region2: #{nn_block_forward.1} parent=1 // pred_check
      _
    $region3: #{nn_block_forward.1} parent=1 // pred_check_branch
      %16 = sbr.rel (0) target = $region5
    $region4: #{nn_block_forward.1} parent=1 // pred_region
      _
    $region5: #{nn_block_forward.1} parent=1 // pred_fallthru
      _
    // Predicated region
    $region6: #{nn_block_forward.1} parent=1 // pred_check
      _
    $region7: #{nn_block_forward.1} parent=1 // pred_check_branch
      %18 = sbr.rel (0) target = $region9
    $region8: #{nn_block_forward.1} parent=1 // pred_region
      _
    $region9: #{nn_block_forward.1} parent=1 // pred_fallthru
      _
    // Predicated region
    $region10: #{nn_block_forward.1} parent=1 // pred_check
      _
    $region11: #{nn_block_forward.1} parent=1 // pred_check_branch
      %20 = sbr.rel (0) target = $region13
    $region12: #{nn_block_forward.1} parent=1 // pred_region
      _
    $region13: #{nn_block_forward.1} parent=1 // pred_fallthru
      _
    // Predicated region
    $region14: #{nn_block_forward.1} parent=1 // pred_check
      _
    $region15: #{nn_block_forward.1} parent=1 // pred_check_branch
      %22 = sbr.rel (0) target = $region17
    $region16: #{nn_block_forward.1} parent=1 // pred_region
      _
    $region17: #{nn_block_forward.1} parent=1 // pred_fallthru
      _
    // Predicated region
    $region18: #{nn_block_forward.1} parent=1 // pred_check
      _
    $region19: #{nn_block_forward.1} parent=1 // pred_check_branch
      %24 = sbr.rel (0) target = $region21
    $region20: #{nn_block_forward.1} parent=1 // pred_region
      _
    $region21: #{nn_block_forward.1} parent=1 // pred_fallthru
      _
    // Predicated region
    $region22: #{nn_block_forward.1} parent=1 // pred_check
      _
    $region23: #{nn_block_forward.1} parent=1 // pred_check_branch
      %26 = sbr.rel (0) target = $region25
    $region24: #{nn_block_forward.1} parent=1 // pred_region
      _
    $region25: #{nn_block_forward.1} parent=1 // pred_fallthru
      _
    // Predicated region
    $region26: #{nn_block_forward.1} parent=1 // pred_check
      _
    $region27: #{nn_block_forward.1} parent=1 // pred_check_branch
      %28 = sbr.rel (0) target = $region29
    $region28: #{nn_block_forward.1} parent=1 // pred_region
      _
    $region29: #{nn_block_forward.1} parent=1 // pred_fallthru
      _
    // Predicated region
    $region30: #{nn_block_forward.1} parent=1 // pred_check
      _
    $region31: #{nn_block_forward.1} parent=1 // pred_check_branch
      %30 = sbr.rel (0) target = $region33
    $region32: #{nn_block_forward.1} parent=1 // pred_region
      _
    $region33: #{nn_block_forward.1} parent=1 // pred_fallthru
      _
    // Predicated region
    $region34: #{nn_block_forward.1} parent=1 // pred_check
      _
    $region35: #{nn_block_forward.1} parent=1 // pred_check_branch
      %32 = sbr.rel (0) target = $region37
    $region36: #{nn_block_forward.1} parent=1 // pred_region
      _
    $region37: #{nn_block_forward.1} parent=1 // pred_fallthru
      _
    %v33 = vld [vmem:[%s0] sm:$0x3]
    %v34 = vld [vmem:[%s1] sm:$0xff]
    %v35 = vld [vmem:[%s1 + $0x8] sm:$0xff]
    %v36 = vld [vmem:[%s1 + $0x10] sm:$0xff]
    %v37 = vld [vmem:[%s1 + $0x18] sm:$0xff]
    %v38 = vld [vmem:[%s1 + $0x20] sm:$0xff]
    %v39 = vld [vmem:[%s1 + $0x28] sm:$0xff]
    %v40 = vld [vmem:[%s1 + $0x30] sm:$0xff]
    %v41 = vld [vmem:[%s1 + $0x38] sm:$0xff]
    %v42 = vld [vmem:[%s1 + $0x40] sm:$0xff]
    %v43 = vld [vmem:[%s1 + $0x48] sm:$0xff]
    %v44 = vld [vmem:[%s1 + $0x50] sm:$0xff]
    %v45 = vld [vmem:[%s1 + $0x58] sm:$0xff]
    %v46 = vld [vmem:[%s1 + $0x60] sm:$0xff]
    %v47 = vld [vmem:[%s1 + $0x68] sm:$0xff]
    %v48 = vld [vmem:[%s1 + $0x70] sm:$0xff]
    %v49 = vld [vmem:[%s1 + $0x78] sm:$0xff]
    %51 = vset.pattern.permute.xlu0 0
    %52 = vperm.xlu0 %51, %v34
    %v53 = vpop.permute.xlu0 %52
    %56 = vset.pattern.permute.xlu0 0
    %57 = vperm.xlu0 %56, %v35
    %v58 = vpop.permute.xlu0 %57
    %61 = vset.pattern.permute.xlu0 0
    %62 = vperm.xlu0 %61, %v36
    %v63 = vpop.permute.xlu0 %62
    %66 = vset.pattern.permute.xlu0 0
    %67 = vperm.xlu0 %66, %v37
    %v68 = vpop.permute.xlu0 %67
    %71 = vset.pattern.permute.xlu0 0
    %72 = vperm.xlu0 %71, %v38
    %v73 = vpop.permute.xlu0 %72
    %76 = vset.pattern.permute.xlu0 0
    %77 = vperm.xlu0 %76, %v39
    %v78 = vpop.permute.xlu0 %77
    %81 = vset.pattern.permute.xlu0 0
    %82 = vperm.xlu0 %81, %v40
    %v83 = vpop.permute.xlu0 %82
    %86 = vset.pattern.permute.xlu0 0
    %87 = vperm.xlu0 %86, %v41
    %v88 = vpop.permute.xlu0 %87
    %91 = vset.pattern.permute.xlu0 0
    %92 = vperm.xlu0 %91, %v42
    %v93 = vpop.permute.xlu0 %92
    %96 = vset.pattern.permute.xlu0 0
    %97 = vperm.xlu0 %96, %v43
    %v98 = vpop.permute.xlu0 %97
    %101 = vset.pattern.permute.xlu0 0
    %102 = vperm.xlu0 %101, %v44
    %v103 = vpop.permute.xlu0 %102
    %106 = vset.pattern.permute.xlu0 0
    %107 = vperm.xlu0 %106, %v45
    %v108 = vpop.permute.xlu0 %107
    %111 = vset.pattern.permute.xlu0 0
    %112 = vperm.xlu0 %111, %v46
    %v113 = vpop.permute.xlu0 %112
    %116 = vset.pattern.permute.xlu0 0
    %117 = vperm.xlu0 %116, %v47
    %v118 = vpop.permute.xlu0 %117
    %121 = vset.pattern.permute.xlu0 0
    %122 = vperm.xlu0 %121, %v48
    %v123 = vpop.permute.xlu0 %122
    %126 = vset.pattern.permute.xlu0 0
    %127 = vperm.xlu0 %126, %v49
    %v128 = vpop.permute.xlu0 %127
    %v130 = vlaneseq
    %v131 = vshrl.u32 %v130, 7
    %v132 = vsub.s32 0, %v131
    %v133 = vrot.slane %v33, %v132
    %v134 = vmul.f32 %v53, %v133
    %v135 = vmul.f32 %v58, %v133
    %v136 = vmul.f32 %v63, %v133
    %v137 = vmul.f32 %v68, %v133
    %v138 = vmul.f32 %v73, %v133
    %v139 = vmul.f32 %v78, %v133
    %v140 = vmul.f32 %v83, %v133
    %v141 = vmul.f32 %v88, %v133
    %v142 = vmul.f32 %v93, %v133
    %v143 = vmul.f32 %v98, %v133
    %v144 = vmul.f32 %v103, %v133
    %v145 = vmul.f32 %v108, %v133
    %v146 = vmul.f32 %v113, %v133
    %v147 = vmul.f32 %v118, %v133
    %v148 = vmul.f32 %v123, %v133
    %v149 = vmul.f32 %v128, %v133
    %150 = vset.pattern.permute.xlu0 1
    %151 = vperm.xlu0 %150, %v34
    %v152 = vpop.permute.xlu0 %151
    %154 = vset.pattern.permute.xlu0 1
    %155 = vperm.xlu0 %154, %v35
    %v156 = vpop.permute.xlu0 %155
    %158 = vset.pattern.permute.xlu0 1
    %159 = vperm.xlu0 %158, %v36
    %v160 = vpop.permute.xlu0 %159
    %162 = vset.pattern.permute.xlu0 1
    %163 = vperm.xlu0 %162, %v37
    %v164 = vpop.permute.xlu0 %163
    %166 = vset.pattern.permute.xlu0 1
    %167 = vperm.xlu0 %166, %v38
    %v168 = vpop.permute.xlu0 %167
    %170 = vset.pattern.permute.xlu0 1
    %171 = vperm.xlu0 %170, %v39
    %v172 = vpop.permute.xlu0 %171
    %174 = vset.pattern.permute.xlu0 1
    %175 = vperm.xlu0 %174, %v40
    %v176 = vpop.permute.xlu0 %175
    %178 = vset.pattern.permute.xlu0 1
    %179 = vperm.xlu0 %178, %v41
    %v180 = vpop.permute.xlu0 %179
    %182 = vset.pattern.permute.xlu0 1
    %183 = vperm.xlu0 %182, %v42
    %v184 = vpop.permute.xlu0 %183
    %186 = vset.pattern.permute.xlu0 1
    %187 = vperm.xlu0 %186, %v43
    %v188 = vpop.permute.xlu0 %187
    %190 = vset.pattern.permute.xlu0 1
    %191 = vperm.xlu0 %190, %v44
    %v192 = vpop.permute.xlu0 %191
    %194 = vset.pattern.permute.xlu0 1
    %195 = vperm.xlu0 %194, %v45
    %v196 = vpop.permute.xlu0 %195
    %198 = vset.pattern.permute.xlu0 1
    %199 = vperm.xlu0 %198, %v46
    %v200 = vpop.permute.xlu0 %199
    %202 = vset.pattern.permute.xlu0 1
    %203 = vperm.xlu0 %202, %v47
    %v204 = vpop.permute.xlu0 %203
    %206 = vset.pattern.permute.xlu0 1
    %207 = vperm.xlu0 %206, %v48
    %v208 = vpop.permute.xlu0 %207
    %210 = vset.pattern.permute.xlu0 1
    %211 = vperm.xlu0 %210, %v49
    %v212 = vpop.permute.xlu0 %211
    %v214 = vlaneseq
    %v215 = vshrl.u32 %v214, 7
    %v216 = vsub.s32 1, %v215
    %v217 = vrot.slane %v33, %v216
    %v218 = vmul.f32 %v152, %v217
    %v219 = vmul.f32 %v156, %v217
    %v220 = vmul.f32 %v160, %v217
    %v221 = vmul.f32 %v164, %v217
    %v222 = vmul.f32 %v168, %v217
    %v223 = vmul.f32 %v172, %v217
    %v224 = vmul.f32 %v176, %v217
    %v225 = vmul.f32 %v180, %v217
    %v226 = vmul.f32 %v184, %v217
    %v227 = vmul.f32 %v188, %v217
    %v228 = vmul.f32 %v192, %v217
    %v229 = vmul.f32 %v196, %v217
    %v230 = vmul.f32 %v200, %v217
    %v231 = vmul.f32 %v204, %v217
    %v232 = vmul.f32 %v208, %v217
    %v233 = vmul.f32 %v212, %v217
    %v234 = vadd.f32 %v134, %v218
    %v235 = vadd.f32 %v135, %v219
    %v236 = vadd.f32 %v136, %v220
    %v237 = vadd.f32 %v137, %v221
    %v238 = vadd.f32 %v138, %v222
    %v239 = vadd.f32 %v139, %v223
    %v240 = vadd.f32 %v140, %v224
    %v241 = vadd.f32 %v141, %v225
    %v242 = vadd.f32 %v142, %v226
    %v243 = vadd.f32 %v143, %v227
    %v244 = vadd.f32 %v144, %v228
    %v245 = vadd.f32 %v145, %v229
    %v246 = vadd.f32 %v146, %v230
    %v247 = vadd.f32 %v147, %v231
    %v248 = vadd.f32 %v148, %v232
    %v249 = vadd.f32 %v149, %v233
    %v250 = vld [vmem:[%s2] sm:$0xff]
    %v251 = vld [vmem:[%s2 + $0x8] sm:$0xff]
    %v252 = vld [vmem:[%s2 + $0x10] sm:$0xff]
    %v253 = vld [vmem:[%s2 + $0x18] sm:$0xff]
    %v254 = vld [vmem:[%s2 + $0x20] sm:$0xff]
    %v255 = vld [vmem:[%s2 + $0x28] sm:$0xff]
    %v256 = vld [vmem:[%s2 + $0x30] sm:$0xff]
    %v257 = vld [vmem:[%s2 + $0x38] sm:$0xff]
    %v258 = vld [vmem:[%s2 + $0x40] sm:$0xff]
    %v259 = vld [vmem:[%s2 + $0x48] sm:$0xff]
    %v260 = vld [vmem:[%s2 + $0x50] sm:$0xff]
    %v261 = vld [vmem:[%s2 + $0x58] sm:$0xff]
    %v262 = vld [vmem:[%s2 + $0x60] sm:$0xff]
    %v263 = vld [vmem:[%s2 + $0x68] sm:$0xff]
    %v264 = vld [vmem:[%s2 + $0x70] sm:$0xff]
    %v265 = vld [vmem:[%s2 + $0x78] sm:$0xff]
    %267 = vset.pattern.permute.xlu0 0
    %268 = vperm.xlu0 %267, %v250
    %v269 = vpop.permute.xlu0 %268
    %272 = vset.pattern.permute.xlu0 0
    %273 = vperm.xlu0 %272, %v251
    %v274 = vpop.permute.xlu0 %273
    %277 = vset.pattern.permute.xlu0 0
    %278 = vperm.xlu0 %277, %v252
    %v279 = vpop.permute.xlu0 %278
    %282 = vset.pattern.permute.xlu0 0
    %283 = vperm.xlu0 %282, %v253
    %v284 = vpop.permute.xlu0 %283
    %287 = vset.pattern.permute.xlu0 0
    %288 = vperm.xlu0 %287, %v254
    %v289 = vpop.permute.xlu0 %288
    %292 = vset.pattern.permute.xlu0 0
    %293 = vperm.xlu0 %292, %v255
    %v294 = vpop.permute.xlu0 %293
    %297 = vset.pattern.permute.xlu0 0
    %298 = vperm.xlu0 %297, %v256
    %v299 = vpop.permute.xlu0 %298
    %302 = vset.pattern.permute.xlu0 0
    %303 = vperm.xlu0 %302, %v257
    %v304 = vpop.permute.xlu0 %303
    %307 = vset.pattern.permute.xlu0 0
    %308 = vperm.xlu0 %307, %v258
    %v309 = vpop.permute.xlu0 %308
    %312 = vset.pattern.permute.xlu0 0
    %313 = vperm.xlu0 %312, %v259
    %v314 = vpop.permute.xlu0 %313
    %317 = vset.pattern.permute.xlu0 0
    %318 = vperm.xlu0 %317, %v260
    %v319 = vpop.permute.xlu0 %318
    %322 = vset.pattern.permute.xlu0 0
    %323 = vperm.xlu0 %322, %v261
    %v324 = vpop.permute.xlu0 %323
    %327 = vset.pattern.permute.xlu0 0
    %328 = vperm.xlu0 %327, %v262
    %v329 = vpop.permute.xlu0 %328
    %332 = vset.pattern.permute.xlu0 0
    %333 = vperm.xlu0 %332, %v263
    %v334 = vpop.permute.xlu0 %333
    %337 = vset.pattern.permute.xlu0 0
    %338 = vperm.xlu0 %337, %v264
    %v339 = vpop.permute.xlu0 %338
    %342 = vset.pattern.permute.xlu0 0
    %343 = vperm.xlu0 %342, %v265
    %v344 = vpop.permute.xlu0 %343
    %v346 = vadd.f32 %v234, %v269
    %v347 = vadd.f32 %v235, %v274
    %v348 = vadd.f32 %v236, %v279
    %v349 = vadd.f32 %v237, %v284
    %v350 = vadd.f32 %v238, %v289
    %v351 = vadd.f32 %v239, %v294
    %v352 = vadd.f32 %v240, %v299
    %v353 = vadd.f32 %v241, %v304
    %v354 = vadd.f32 %v242, %v309
    %v355 = vadd.f32 %v243, %v314
    %v356 = vadd.f32 %v244, %v319
    %v357 = vadd.f32 %v245, %v324
    %v358 = vadd.f32 %v246, %v329
    %v359 = vadd.f32 %v247, %v334
    %v360 = vadd.f32 %v248, %v339
    %v361 = vadd.f32 %v249, %v344
    %v362 = vmax.f32 %v346, 0.0
    %v363 = vmax.f32 %v347, 0.0
    %v364 = vmax.f32 %v348, 0.0
    %v365 = vmax.f32 %v349, 0.0
    %v366 = vmax.f32 %v350, 0.0
    %v367 = vmax.f32 %v351, 0.0
    %v368 = vmax.f32 %v352, 0.0
    %v369 = vmax.f32 %v353, 0.0
    %v370 = vmax.f32 %v354, 0.0
    %v371 = vmax.f32 %v355, 0.0
    %v372 = vmax.f32 %v356, 0.0
    %v373 = vmax.f32 %v357, 0.0
    %v374 = vmax.f32 %v358, 0.0
    %v375 = vmax.f32 %v359, 0.0
    %v376 = vmax.f32 %v360, 0.0
    %v377 = vmax.f32 %v361, 0.0
    %v378 = vld [vmem:[%s3] sm:$0xff]
    %v379 = vld [vmem:[%s3 + $0x8] sm:$0xff]
    %v380 = vld [vmem:[%s3 + $0x10] sm:$0xff]
    %v381 = vld [vmem:[%s3 + $0x18] sm:$0xff]
    %v382 = vld [vmem:[%s3 + $0x20] sm:$0xff]
    %v383 = vld [vmem:[%s3 + $0x28] sm:$0xff]
    %v384 = vld [vmem:[%s3 + $0x30] sm:$0xff]
    %v385 = vld [vmem:[%s3 + $0x38] sm:$0xff]
    %v386 = vld [vmem:[%s3 + $0x40] sm:$0xff]
    %v387 = vld [vmem:[%s3 + $0x48] sm:$0xff]
    %v388 = vld [vmem:[%s3 + $0x50] sm:$0xff]
    %v389 = vld [vmem:[%s3 + $0x58] sm:$0xff]
    %v390 = vld [vmem:[%s3 + $0x60] sm:$0xff]
    %v391 = vld [vmem:[%s3 + $0x68] sm:$0xff]
    %v392 = vld [vmem:[%s3 + $0x70] sm:$0xff]
    %v393 = vld [vmem:[%s3 + $0x78] sm:$0xff]
    %v394 = vld [vmem:[%s4] sm:$0xff]
    %v395 = vld [vmem:[%s4 + $0x8] sm:$0xff]
    %v396 = vld [vmem:[%s4 + $0x10] sm:$0xff]
    %v397 = vld [vmem:[%s4 + $0x18] sm:$0xff]
    %v398 = vld [vmem:[%s4 + $0x20] sm:$0xff]
    %v399 = vld [vmem:[%s4 + $0x28] sm:$0xff]
    %v400 = vld [vmem:[%s4 + $0x30] sm:$0xff]
    %v401 = vld [vmem:[%s4 + $0x38] sm:$0xff]
    %v402 = vld [vmem:[%s4 + $0x40] sm:$0xff]
    %v403 = vld [vmem:[%s4 + $0x48] sm:$0xff]
    %v404 = vld [vmem:[%s4 + $0x50] sm:$0xff]
    %v405 = vld [vmem:[%s4 + $0x58] sm:$0xff]
    %v406 = vld [vmem:[%s4 + $0x60] sm:$0xff]
    %v407 = vld [vmem:[%s4 + $0x68] sm:$0xff]
    %v408 = vld [vmem:[%s4 + $0x70] sm:$0xff]
    %v409 = vld [vmem:[%s4 + $0x78] sm:$0xff]
    %411 = vset.pattern.permute.xlu0 0
    %412 = vperm.xlu0 %411, %v394
    %v413 = vpop.permute.xlu0 %412
    %416 = vset.pattern.permute.xlu0 0
    %417 = vperm.xlu0 %416, %v395
    %v418 = vpop.permute.xlu0 %417
    %421 = vset.pattern.permute.xlu0 0
    %422 = vperm.xlu0 %421, %v396
    %v423 = vpop.permute.xlu0 %422
    %426 = vset.pattern.permute.xlu0 0
    %427 = vperm.xlu0 %426, %v397
    %v428 = vpop.permute.xlu0 %427
    %431 = vset.pattern.permute.xlu0 0
    %432 = vperm.xlu0 %431, %v398
    %v433 = vpop.permute.xlu0 %432
    %436 = vset.pattern.permute.xlu0 0
    %437 = vperm.xlu0 %436, %v399
    %v438 = vpop.permute.xlu0 %437
    %441 = vset.pattern.permute.xlu0 0
    %442 = vperm.xlu0 %441, %v400
    %v443 = vpop.permute.xlu0 %442
    %446 = vset.pattern.permute.xlu0 0
    %447 = vperm.xlu0 %446, %v401
    %v448 = vpop.permute.xlu0 %447
    %451 = vset.pattern.permute.xlu0 0
    %452 = vperm.xlu0 %451, %v402
    %v453 = vpop.permute.xlu0 %452
    %456 = vset.pattern.permute.xlu0 0
    %457 = vperm.xlu0 %456, %v403
    %v458 = vpop.permute.xlu0 %457
    %461 = vset.pattern.permute.xlu0 0
    %462 = vperm.xlu0 %461, %v404
    %v463 = vpop.permute.xlu0 %462
    %466 = vset.pattern.permute.xlu0 0
    %467 = vperm.xlu0 %466, %v405
    %v468 = vpop.permute.xlu0 %467
    %471 = vset.pattern.permute.xlu0 0
    %472 = vperm.xlu0 %471, %v406
    %v473 = vpop.permute.xlu0 %472
    %476 = vset.pattern.permute.xlu0 0
    %477 = vperm.xlu0 %476, %v407
    %v478 = vpop.permute.xlu0 %477
    %481 = vset.pattern.permute.xlu0 0
    %482 = vperm.xlu0 %481, %v408
    %v483 = vpop.permute.xlu0 %482
    %486 = vset.pattern.permute.xlu0 0
    %487 = vperm.xlu0 %486, %v409
    %v488 = vpop.permute.xlu0 %487
    %490 = vmatprep.subr.mxu0 0.0
    %491 = vmatpush1.msra.mxu0 %v377
    %492 = vmatprep.subr.mxu0 0.0
    %493 = vmatpush1.msra.mxu0 %v376
    %494 = vmatprep.subr.mxu0 0.0
    %495 = vmatpush1.msra.mxu0 %v375
    %496 = vmatprep.subr.mxu0 0.0
    %497 = vmatpush1.msra.mxu0 %v374
    %498 = vmatprep.subr.mxu0 0.0
    %499 = vmatpush1.msra.mxu0 %v373
    %500 = vmatprep.subr.mxu0 0.0
    %501 = vmatpush1.msra.mxu0 %v372
    %502 = vmatprep.subr.mxu0 0.0
    %503 = vmatpush1.msra.mxu0 %v371
    %504 = vmatprep.subr.mxu0 0.0
    %505 = vmatpush1.msra.mxu0 %v370
    %506 = vmatprep.subr.mxu0 0.0
    %507 = vmatpush1.msra.mxu0 %v369
    %508 = vmatprep.subr.mxu0 0.0
    %509 = vmatpush1.msra.mxu0 %v368
    %510 = vmatprep.subr.mxu0 0.0
    %511 = vmatpush1.msra.mxu0 %v367
    %512 = vmatprep.subr.mxu0 0.0
    %513 = vmatpush1.msra.mxu0 %v366
    %514 = vmatprep.subr.mxu0 0.0
    %515 = vmatpush1.msra.mxu0 %v365
    %516 = vmatprep.subr.mxu0 0.0
    %517 = vmatpush1.msra.mxu0 %v364
    %518 = vmatprep.subr.mxu0 0.0
    %519 = vmatpush1.msra.mxu0 %v363
    %520 = vmatprep.subr.mxu0 0.0
    %521 = vmatpush1.msra.mxu0 %v362
    %522 = vmatprep.subr.mxu0 0.0
    %523 = vmatpush2.msra.mxu0 0.0
    %524 = vmatprep.subr.mxu0 0.0
    %525 = vmatpush2.msra.mxu0 0.0
    %526 = vmatprep.subr.mxu0 0.0
    %527 = vmatpush2.msra.mxu0 0.0
    %528 = vmatprep.subr.mxu0 0.0
    %529 = vmatpush2.msra.mxu0 0.0
    %530 = vmatprep.subr.mxu0 0.0
    %531 = vmatpush2.msra.mxu0 0.0
    %532 = vmatprep.subr.mxu0 0.0
    %533 = vmatpush2.msra.mxu0 0.0
    %534 = vmatprep.subr.mxu0 0.0
    %535 = vmatpush2.msra.mxu0 0.0
    %536 = vmatprep.subr.mxu0 0.0
    %537 = vmatpush2.msra.mxu0 0.0
    %538 = vmatprep.subr.mxu0 0.0
    %539 = vmatpush2.msra.mxu0 0.0
    %540 = vmatprep.subr.mxu0 0.0
    %541 = vmatpush2.msra.mxu0 0.0
    %542 = vmatprep.subr.mxu0 0.0
    %543 = vmatpush2.msra.mxu0 0.0
    %544 = vmatprep.subr.mxu0 0.0
    %545 = vmatpush2.msra.mxu0 0.0
    %546 = vmatprep.subr.mxu0 0.0
    %547 = vmatpush2.msra.mxu0 0.0
    %548 = vmatprep.subr.mxu0 0.0
    %549 = vmatpush2.msra.mxu0 0.0
    %550 = vmatprep.subr.mxu0 0.0
    %551 = vmatpush2.msra.mxu0 0.0
    %552 = vmatprep.subr.mxu0 0.0
    %553 = vmatpush2.msra.mxu0 0.0
    %554 = vmatprep.mubr.f32.mxu0 0.0
    %555 = vmatmul.mubr.f32.gmra.mxu0 %v378
    %v556 = vpop.f32.mrf.mxu0
    %v557 = vadd.f32 %v413, %v556
    %v558 = vpop.f32.mrf.mxu0
    %559 = vmatprep.mubr.f32.mxu0 0.0
    %560 = vmatmul.mubr.f32.gmra.mxu0 %v379
    %v561 = vpop.f32.mrf.mxu0
    %v562 = vadd.f32 %v418, %v561
    %v563 = vpop.f32.mrf.mxu0
    %564 = vmatprep.mubr.f32.mxu0 0.0
    %565 = vmatmul.mubr.f32.gmra.mxu0 %v380
    %v566 = vpop.f32.mrf.mxu0
    %v567 = vadd.f32 %v423, %v566
    %v568 = vpop.f32.mrf.mxu0
    %569 = vmatprep.mubr.f32.mxu0 0.0
    %570 = vmatmul.mubr.f32.gmra.mxu0 %v381
    %v571 = vpop.f32.mrf.mxu0
    %v572 = vadd.f32 %v428, %v571
    %v573 = vpop.f32.mrf.mxu0
    %574 = vmatprep.mubr.f32.mxu0 0.0
    %575 = vmatmul.mubr.f32.gmra.mxu0 %v382
    %v576 = vpop.f32.mrf.mxu0
    %v577 = vadd.f32 %v433, %v576
    %v578 = vpop.f32.mrf.mxu0
    %579 = vmatprep.mubr.f32.mxu0 0.0
    %580 = vmatmul.mubr.f32.gmra.mxu0 %v383
    %v581 = vpop.f32.mrf.mxu0
    %v582 = vadd.f32 %v438, %v581
    %v583 = vpop.f32.mrf.mxu0
    %584 = vmatprep.mubr.f32.mxu0 0.0
    %585 = vmatmul.mubr.f32.gmra.mxu0 %v384
    %v586 = vpop.f32.mrf.mxu0
    %v587 = vadd.f32 %v443, %v586
    %v588 = vpop.f32.mrf.mxu0
    %589 = vmatprep.mubr.f32.mxu0 0.0
    %590 = vmatmul.mubr.f32.gmra.mxu0 %v385
    %v591 = vpop.f32.mrf.mxu0
    %v592 = vadd.f32 %v448, %v591
    %v593 = vpop.f32.mrf.mxu0
    %594 = vmatprep.mubr.f32.mxu0 0.0
    %595 = vmatmul.mubr.f32.gmra.mxu0 %v386
    %v596 = vpop.f32.mrf.mxu0
    %v597 = vadd.f32 %v453, %v596
    %v598 = vpop.f32.mrf.mxu0
    %599 = vmatprep.mubr.f32.mxu0 0.0
    %600 = vmatmul.mubr.f32.gmra.mxu0 %v387
    %v601 = vpop.f32.mrf.mxu0
    %v602 = vadd.f32 %v458, %v601
    %v603 = vpop.f32.mrf.mxu0
    %604 = vmatprep.mubr.f32.mxu0 0.0
    %605 = vmatmul.mubr.f32.gmra.mxu0 %v388
    %v606 = vpop.f32.mrf.mxu0
    %v607 = vadd.f32 %v463, %v606
    %v608 = vpop.f32.mrf.mxu0
    %609 = vmatprep.mubr.f32.mxu0 0.0
    %610 = vmatmul.mubr.f32.gmra.mxu0 %v389
    %v611 = vpop.f32.mrf.mxu0
    %v612 = vadd.f32 %v468, %v611
    %v613 = vpop.f32.mrf.mxu0
    %614 = vmatprep.mubr.f32.mxu0 0.0
    %615 = vmatmul.mubr.f32.gmra.mxu0 %v390
    %v616 = vpop.f32.mrf.mxu0
    %v617 = vadd.f32 %v473, %v616
    %v618 = vpop.f32.mrf.mxu0
    %619 = vmatprep.mubr.f32.mxu0 0.0
    %620 = vmatmul.mubr.f32.gmra.mxu0 %v391
    %v621 = vpop.f32.mrf.mxu0
    %v622 = vadd.f32 %v478, %v621
    %v623 = vpop.f32.mrf.mxu0
    %624 = vmatprep.mubr.f32.mxu0 0.0
    %625 = vmatmul.mubr.f32.gmra.mxu0 %v392
    %v626 = vpop.f32.mrf.mxu0
    %v627 = vadd.f32 %v483, %v626
    %v628 = vpop.f32.mrf.mxu0
    %629 = vmatprep.mubr.f32.mxu0 0.0
    %630 = vmatmul.mubr.f32.gmra.mxu0 %v393
    %v631 = vpop.f32.mrf.mxu0
    %v632 = vadd.f32 %v488, %v631
    %v633 = vpop.f32.mrf.mxu0
    %634 = vdwg.mxu0
    %v635 = vmax.f32 %v557, 0.0
    %v636 = vmax.f32 %v562, 0.0
    %v637 = vmax.f32 %v567, 0.0
    %v638 = vmax.f32 %v572, 0.0
    %v639 = vmax.f32 %v577, 0.0
    %v640 = vmax.f32 %v582, 0.0
    %v641 = vmax.f32 %v587, 0.0
    %v642 = vmax.f32 %v592, 0.0
    %v643 = vmax.f32 %v597, 0.0
    %v644 = vmax.f32 %v602, 0.0
    %v645 = vmax.f32 %v607, 0.0
    %v646 = vmax.f32 %v612, 0.0
    %v647 = vmax.f32 %v617, 0.0
    %v648 = vmax.f32 %v622, 0.0
    %v649 = vmax.f32 %v627, 0.0
    %v650 = vmax.f32 %v632, 0.0
    %v651 = vld [vmem:[%s5] sm:$0xff]
    %v652 = vld [vmem:[%s5 + $0x8] sm:$0xff]
    %v653 = vld [vmem:[%s5 + $0x10] sm:$0xff]
    %v654 = vld [vmem:[%s5 + $0x18] sm:$0xff]
    %v655 = vld [vmem:[%s5 + $0x20] sm:$0xff]
    %v656 = vld [vmem:[%s5 + $0x28] sm:$0xff]
    %v657 = vld [vmem:[%s5 + $0x30] sm:$0xff]
    %v658 = vld [vmem:[%s5 + $0x38] sm:$0xff]
    %v659 = vld [vmem:[%s5 + $0x40] sm:$0xff]
    %v660 = vld [vmem:[%s5 + $0x48] sm:$0xff]
    %v661 = vld [vmem:[%s5 + $0x50] sm:$0xff]
    %v662 = vld [vmem:[%s5 + $0x58] sm:$0xff]
    %v663 = vld [vmem:[%s5 + $0x60] sm:$0xff]
    %v664 = vld [vmem:[%s5 + $0x68] sm:$0xff]
    %v665 = vld [vmem:[%s5 + $0x70] sm:$0xff]
    %v666 = vld [vmem:[%s5 + $0x78] sm:$0xff]
    %v667 = vld [vmem:[%s6] sm:$0xff]
    %v668 = vld [vmem:[%s6 + $0x8] sm:$0xff]
    %v669 = vld [vmem:[%s6 + $0x10] sm:$0xff]
    %v670 = vld [vmem:[%s6 + $0x18] sm:$0xff]
    %v671 = vld [vmem:[%s6 + $0x20] sm:$0xff]
    %v672 = vld [vmem:[%s6 + $0x28] sm:$0xff]
    %v673 = vld [vmem:[%s6 + $0x30] sm:$0xff]
    %v674 = vld [vmem:[%s6 + $0x38] sm:$0xff]
    %v675 = vld [vmem:[%s6 + $0x40] sm:$0xff]
    %v676 = vld [vmem:[%s6 + $0x48] sm:$0xff]
    %v677 = vld [vmem:[%s6 + $0x50] sm:$0xff]
    %v678 = vld [vmem:[%s6 + $0x58] sm:$0xff]
    %v679 = vld [vmem:[%s6 + $0x60] sm:$0xff]
    %v680 = vld [vmem:[%s6 + $0x68] sm:$0xff]
    %v681 = vld [vmem:[%s6 + $0x70] sm:$0xff]
    %v682 = vld [vmem:[%s6 + $0x78] sm:$0xff]
    %684 = vset.pattern.permute.xlu0 0
    %685 = vperm.xlu0 %684, %v667
    %v686 = vpop.permute.xlu0 %685
    %689 = vset.pattern.permute.xlu0 0
    %690 = vperm.xlu0 %689, %v668
    %v691 = vpop.permute.xlu0 %690
    %694 = vset.pattern.permute.xlu0 0
    %695 = vperm.xlu0 %694, %v669
    %v696 = vpop.permute.xlu0 %695
    %699 = vset.pattern.permute.xlu0 0
    %700 = vperm.xlu0 %699, %v670
    %v701 = vpop.permute.xlu0 %700
    %704 = vset.pattern.permute.xlu0 0
    %705 = vperm.xlu0 %704, %v671
    %v706 = vpop.permute.xlu0 %705
    %709 = vset.pattern.permute.xlu0 0
    %710 = vperm.xlu0 %709, %v672
    %v711 = vpop.permute.xlu0 %710
    %714 = vset.pattern.permute.xlu0 0
    %715 = vperm.xlu0 %714, %v673
    %v716 = vpop.permute.xlu0 %715
    %719 = vset.pattern.permute.xlu0 0
    %720 = vperm.xlu0 %719, %v674
    %v721 = vpop.permute.xlu0 %720
    %724 = vset.pattern.permute.xlu0 0
    %725 = vperm.xlu0 %724, %v675
    %v726 = vpop.permute.xlu0 %725
    %729 = vset.pattern.permute.xlu0 0
    %730 = vperm.xlu0 %729, %v676
    %v731 = vpop.permute.xlu0 %730
    %734 = vset.pattern.permute.xlu0 0
    %735 = vperm.xlu0 %734, %v677
    %v736 = vpop.permute.xlu0 %735
    %739 = vset.pattern.permute.xlu0 0
    %740 = vperm.xlu0 %739, %v678
    %v741 = vpop.permute.xlu0 %740
    %744 = vset.pattern.permute.xlu0 0
    %745 = vperm.xlu0 %744, %v679
    %v746 = vpop.permute.xlu0 %745
    %749 = vset.pattern.permute.xlu0 0
    %750 = vperm.xlu0 %749, %v680
    %v751 = vpop.permute.xlu0 %750
    %754 = vset.pattern.permute.xlu0 0
    %755 = vperm.xlu0 %754, %v681
    %v756 = vpop.permute.xlu0 %755
    %759 = vset.pattern.permute.xlu0 0
    %760 = vperm.xlu0 %759, %v682
    %v761 = vpop.permute.xlu0 %760
    %763 = vmatprep.subr.mxu0 0.0
    %764 = vmatpush1.msra.mxu0 %v650
    %765 = vmatprep.subr.mxu0 0.0
    %766 = vmatpush1.msra.mxu0 %v649
    %767 = vmatprep.subr.mxu0 0.0
    %768 = vmatpush1.msra.mxu0 %v648
    %769 = vmatprep.subr.mxu0 0.0
    %770 = vmatpush1.msra.mxu0 %v647
    %771 = vmatprep.subr.mxu0 0.0
    %772 = vmatpush1.msra.mxu0 %v646
    %773 = vmatprep.subr.mxu0 0.0
    %774 = vmatpush1.msra.mxu0 %v645
    %775 = vmatprep.subr.mxu0 0.0
    %776 = vmatpush1.msra.mxu0 %v644
    %777 = vmatprep.subr.mxu0 0.0
    %778 = vmatpush1.msra.mxu0 %v643
    %779 = vmatprep.subr.mxu0 0.0
    %780 = vmatpush1.msra.mxu0 %v642
    %781 = vmatprep.subr.mxu0 0.0
    %782 = vmatpush1.msra.mxu0 %v641
    %783 = vmatprep.subr.mxu0 0.0
    %784 = vmatpush1.msra.mxu0 %v640
    %785 = vmatprep.subr.mxu0 0.0
    %786 = vmatpush1.msra.mxu0 %v639
    %787 = vmatprep.subr.mxu0 0.0
    %788 = vmatpush1.msra.mxu0 %v638
    %789 = vmatprep.subr.mxu0 0.0
    %790 = vmatpush1.msra.mxu0 %v637
    %791 = vmatprep.subr.mxu0 0.0
    %792 = vmatpush1.msra.mxu0 %v636
    %793 = vmatprep.subr.mxu0 0.0
    %794 = vmatpush1.msra.mxu0 %v635
    %795 = vmatprep.subr.mxu0 0.0
    %796 = vmatpush2.msra.mxu0 0.0
    %797 = vmatprep.subr.mxu0 0.0
    %798 = vmatpush2.msra.mxu0 0.0
    %799 = vmatprep.subr.mxu0 0.0
    %800 = vmatpush2.msra.mxu0 0.0
    %801 = vmatprep.subr.mxu0 0.0
    %802 = vmatpush2.msra.mxu0 0.0
    %803 = vmatprep.subr.mxu0 0.0
    %804 = vmatpush2.msra.mxu0 0.0
    %805 = vmatprep.subr.mxu0 0.0
    %806 = vmatpush2.msra.mxu0 0.0
    %807 = vmatprep.subr.mxu0 0.0
    %808 = vmatpush2.msra.mxu0 0.0
    %809 = vmatprep.subr.mxu0 0.0
    %810 = vmatpush2.msra.mxu0 0.0
    %811 = vmatprep.subr.mxu0 0.0
    %812 = vmatpush2.msra.mxu0 0.0
    %813 = vmatprep.subr.mxu0 0.0
    %814 = vmatpush2.msra.mxu0 0.0
    %815 = vmatprep.subr.mxu0 0.0
    %816 = vmatpush2.msra.mxu0 0.0
    %817 = vmatprep.subr.mxu0 0.0
    %818 = vmatpush2.msra.mxu0 0.0
    %819 = vmatprep.subr.mxu0 0.0
    %820 = vmatpush2.msra.mxu0 0.0
    %821 = vmatprep.subr.mxu0 0.0
    %822 = vmatpush2.msra.mxu0 0.0
    %823 = vmatprep.subr.mxu0 0.0
    %824 = vmatpush2.msra.mxu0 0.0
    %825 = vmatprep.subr.mxu0 0.0
    %826 = vmatpush2.msra.mxu0 0.0
    %827 = vmatprep.mubr.f32.mxu0 0.0
    %828 = vmatmul.mubr.f32.gmra.mxu0 %v651
    %v829 = vpop.f32.mrf.mxu0
    %v830 = vadd.f32 %v686, %v829
    %v831 = vpop.f32.mrf.mxu0
    %832 = vmatprep.mubr.f32.mxu0 0.0
    %833 = vmatmul.mubr.f32.gmra.mxu0 %v652
    %v834 = vpop.f32.mrf.mxu0
    %v835 = vadd.f32 %v691, %v834
    %v836 = vpop.f32.mrf.mxu0
    %837 = vmatprep.mubr.f32.mxu0 0.0
    %838 = vmatmul.mubr.f32.gmra.mxu0 %v653
    %v839 = vpop.f32.mrf.mxu0
    %v840 = vadd.f32 %v696, %v839
    %v841 = vpop.f32.mrf.mxu0
    %842 = vmatprep.mubr.f32.mxu0 0.0
    %843 = vmatmul.mubr.f32.gmra.mxu0 %v654
    %v844 = vpop.f32.mrf.mxu0
    %v845 = vadd.f32 %v701, %v844
    %v846 = vpop.f32.mrf.mxu0
    %847 = vmatprep.mubr.f32.mxu0 0.0
    %848 = vmatmul.mubr.f32.gmra.mxu0 %v655
    %v849 = vpop.f32.mrf.mxu0
    %v850 = vadd.f32 %v706, %v849
    %v851 = vpop.f32.mrf.mxu0
    %852 = vmatprep.mubr.f32.mxu0 0.0
    %853 = vmatmul.mubr.f32.gmra.mxu0 %v656
    %v854 = vpop.f32.mrf.mxu0
    %v855 = vadd.f32 %v711, %v854
    %v856 = vpop.f32.mrf.mxu0
    %857 = vmatprep.mubr.f32.mxu0 0.0
    %858 = vmatmul.mubr.f32.gmra.mxu0 %v657
    %v859 = vpop.f32.mrf.mxu0
    %v860 = vadd.f32 %v716, %v859
    %v861 = vpop.f32.mrf.mxu0
    %862 = vmatprep.mubr.f32.mxu0 0.0
    %863 = vmatmul.mubr.f32.gmra.mxu0 %v658
    %v864 = vpop.f32.mrf.mxu0
    %v865 = vadd.f32 %v721, %v864
    %v866 = vpop.f32.mrf.mxu0
    %867 = vmatprep.mubr.f32.mxu0 0.0
    %868 = vmatmul.mubr.f32.gmra.mxu0 %v659
    %v869 = vpop.f32.mrf.mxu0
    %v870 = vadd.f32 %v726, %v869
    %v871 = vpop.f32.mrf.mxu0
    %872 = vmatprep.mubr.f32.mxu0 0.0
    %873 = vmatmul.mubr.f32.gmra.mxu0 %v660
    %v874 = vpop.f32.mrf.mxu0
    %v875 = vadd.f32 %v731, %v874
    %v876 = vpop.f32.mrf.mxu0
    %877 = vmatprep.mubr.f32.mxu0 0.0
    %878 = vmatmul.mubr.f32.gmra.mxu0 %v661
    %v879 = vpop.f32.mrf.mxu0
    %v880 = vadd.f32 %v736, %v879
    %v881 = vpop.f32.mrf.mxu0
    %882 = vmatprep.mubr.f32.mxu0 0.0
    %883 = vmatmul.mubr.f32.gmra.mxu0 %v662
    %v884 = vpop.f32.mrf.mxu0
    %v885 = vadd.f32 %v741, %v884
    %v886 = vpop.f32.mrf.mxu0
    %887 = vmatprep.mubr.f32.mxu0 0.0
    %888 = vmatmul.mubr.f32.gmra.mxu0 %v663
    %v889 = vpop.f32.mrf.mxu0
    %v890 = vadd.f32 %v746, %v889
    %v891 = vpop.f32.mrf.mxu0
    %892 = vmatprep.mubr.f32.mxu0 0.0
    %893 = vmatmul.mubr.f32.gmra.mxu0 %v664
    %v894 = vpop.f32.mrf.mxu0
    %v895 = vadd.f32 %v751, %v894
    %v896 = vpop.f32.mrf.mxu0
    %897 = vmatprep.mubr.f32.mxu0 0.0
    %898 = vmatmul.mubr.f32.gmra.mxu0 %v665
    %v899 = vpop.f32.mrf.mxu0
    %v900 = vadd.f32 %v756, %v899
    %v901 = vpop.f32.mrf.mxu0
    %902 = vmatprep.mubr.f32.mxu0 0.0
    %903 = vmatmul.mubr.f32.gmra.mxu0 %v666
    %v904 = vpop.f32.mrf.mxu0
    %v905 = vadd.f32 %v761, %v904
    %v906 = vpop.f32.mrf.mxu0
    %907 = vdwg.mxu0
    %v908 = vmax.f32 %v830, 0.0
    %v909 = vmax.f32 %v835, 0.0
    %v910 = vmax.f32 %v840, 0.0
    %v911 = vmax.f32 %v845, 0.0
    %v912 = vmax.f32 %v850, 0.0
    %v913 = vmax.f32 %v855, 0.0
    %v914 = vmax.f32 %v860, 0.0
    %v915 = vmax.f32 %v865, 0.0
    %v916 = vmax.f32 %v870, 0.0
    %v917 = vmax.f32 %v875, 0.0
    %v918 = vmax.f32 %v880, 0.0
    %v919 = vmax.f32 %v885, 0.0
    %v920 = vmax.f32 %v890, 0.0
    %v921 = vmax.f32 %v895, 0.0
    %v922 = vmax.f32 %v900, 0.0
    %v923 = vmax.f32 %v905, 0.0
    %v924 = vld [vmem:[%s7] sm:$0xff]
    %925 = vmatprep.subr.mxu0 0.0
    %926 = vmatpush1.msra.mxu0 %v923
    %927 = vmatprep.subr.mxu0 0.0
    %928 = vmatpush1.msra.mxu0 %v922
    %929 = vmatprep.subr.mxu0 0.0
    %930 = vmatpush1.msra.mxu0 %v921
    %931 = vmatprep.subr.mxu0 0.0
    %932 = vmatpush1.msra.mxu0 %v920
    %933 = vmatprep.subr.mxu0 0.0
    %934 = vmatpush1.msra.mxu0 %v919
    %935 = vmatprep.subr.mxu0 0.0
    %936 = vmatpush1.msra.mxu0 %v918
    %937 = vmatprep.subr.mxu0 0.0
    %938 = vmatpush1.msra.mxu0 %v917
    %939 = vmatprep.subr.mxu0 0.0
    %940 = vmatpush1.msra.mxu0 %v916
    %941 = vmatprep.subr.mxu0 0.0
    %942 = vmatpush1.msra.mxu0 %v915
    %943 = vmatprep.subr.mxu0 0.0
    %944 = vmatpush1.msra.mxu0 %v914
    %945 = vmatprep.subr.mxu0 0.0
    %946 = vmatpush1.msra.mxu0 %v913
    %947 = vmatprep.subr.mxu0 0.0
    %948 = vmatpush1.msra.mxu0 %v912
    %949 = vmatprep.subr.mxu0 0.0
    %950 = vmatpush1.msra.mxu0 %v911
    %951 = vmatprep.subr.mxu0 0.0
    %952 = vmatpush1.msra.mxu0 %v910
    %953 = vmatprep.subr.mxu0 0.0
    %954 = vmatpush1.msra.mxu0 %v909
    %955 = vmatprep.subr.mxu0 0.0
    %956 = vmatpush1.msra.mxu0 %v908
    %957 = vmatprep.subr.mxu0 0.0
    %958 = vmatpush2.msra.mxu0 0.0
    %959 = vmatprep.subr.mxu0 0.0
    %960 = vmatpush2.msra.mxu0 0.0
    %961 = vmatprep.subr.mxu0 0.0
    %962 = vmatpush2.msra.mxu0 0.0
    %963 = vmatprep.subr.mxu0 0.0
    %964 = vmatpush2.msra.mxu0 0.0
    %965 = vmatprep.subr.mxu0 0.0
    %966 = vmatpush2.msra.mxu0 0.0
    %967 = vmatprep.subr.mxu0 0.0
    %968 = vmatpush2.msra.mxu0 0.0
    %969 = vmatprep.subr.mxu0 0.0
    %970 = vmatpush2.msra.mxu0 0.0
    %971 = vmatprep.subr.mxu0 0.0
    %972 = vmatpush2.msra.mxu0 0.0
    %973 = vmatprep.subr.mxu0 0.0
    %974 = vmatpush2.msra.mxu0 0.0
    %975 = vmatprep.subr.mxu0 0.0
    %976 = vmatpush2.msra.mxu0 0.0
    %977 = vmatprep.subr.mxu0 0.0
    %978 = vmatpush2.msra.mxu0 0.0
    %979 = vmatprep.subr.mxu0 0.0
    %980 = vmatpush2.msra.mxu0 0.0
    %981 = vmatprep.subr.mxu0 0.0
    %982 = vmatpush2.msra.mxu0 0.0
    %983 = vmatprep.subr.mxu0 0.0
    %984 = vmatpush2.msra.mxu0 0.0
    %985 = vmatprep.subr.mxu0 0.0
    %986 = vmatpush2.msra.mxu0 0.0
    %987 = vmatprep.subr.mxu0 0.0
    %988 = vmatpush2.msra.mxu0 0.0
    %989 = vmatprep.mubr.f32.mxu0 0.0
    %990 = vmatmul.mubr.f32.gmra.mxu0 %v924
    %v991 = vpop.f32.mrf.mxu0
    %v992 = vadd.f32 0.0, %v991
    %v993 = vpop.f32.mrf.mxu0
    %994 = vdwg.mxu0
    %v995 = vld [vmem:[%s8] sm:$0x3]
    %997 = vset.pattern.permute.xlu0 0
    %998 = vperm.xlu0 %997, %v995
    %v999 = vpop.permute.xlu0 %998
    %v1001 = vadd.f32 %v992, %v999
    %1002 = vst [vmem:[#allocation2] sm:$0x3] %v1001
    // Predicated region
    $region38: #{nn_block_forward.1} parent=1 // pred_check
      _
    $region39: #{nn_block_forward.1} parent=1 // pred_check_branch
      %1004 = sbr.rel (0) target = $region41
    $region40: #{nn_block_forward.1} parent=1 // pred_region
      %s1006 = ssub.s32 32, 32
      %1007 = vsyncadd [#allocation3], %s1006
      %s1009 = sshll.u32 [#allocation2], 4
      %s1010 = int_to_ptr.vmem [resolvable:$true] %s1009
      %1012 = dma.vmem_to_hbm [thread:$0]  %s1010, 32, %s9, [#allocation3]
    $region41: #{nn_block_forward.1} parent=1 // pred_fallthru
      _
    // Predicated region
    $region42: #{nn_block_forward.1} parent=1 // pred_check
      _
    $region43: #{nn_block_forward.1} parent=1 // pred_check_branch
      %1014 = sbr.rel (0) target = $region45
    $region44: #{nn_block_forward.1} parent=1 // pred_region
      %1015 = dma.done [#allocation3], 32
    $region45: #{nn_block_forward.1} parent=1 // pred_fallthru
      _
    %1016 = vsyncpa [#allocation3], 1

</llo_original>
